<compile_context>
chip_gen: v5e
topology: v5e:2x2
jax: 0.10.0
libtpu: 0.0.40
codegen_flags: <defaults>
</compile_context>

<pallas_src>
import functools

import jax
import jax.numpy as jnp
from jax import lax
from jax.experimental import pallas as pl
from jax.experimental.pallas import tpu as pltpu

EPS = 1e-5


def _round_up(x, m):
    return (x + m - 1) // m * m


def _vmem_ceiling_bytes():
    """~80% of per-TensorCore VMEM (v5e/v6e: 128 MiB, v7x: 64 MiB)."""
    cap = 64 << 20  # conservative fallback = v7x per-TC size
    try:
        cap = int(getattr(pltpu.get_tpu_info(), "vmem_capacity_bytes", cap))
    except Exception:
        pass
    return max(16 << 20, int(cap * 0.8))


def _estimate_vmem_bytes(n_pad, tk, tn, in_itemsize):
    """Exact per-buffer sum for the chosen tiling (default double-buffering)."""
    x_buf = 2 * n_pad * tk * in_itemsize        # x tile (double-buffered)
    w_buf = 2 * tn * tk * in_itemsize           # W tile (double-buffered)
    o_buf = 2 * n_pad * tn * 4                  # resident f32 output/accumulator
    gb_buf = 2 * 2 * 8 * tn * 4                 # gamma/beta (1,tn) -> 8 sublanes
    return x_buf + w_buf + o_buf + gb_buf


def _pad2(a, rows, cols):
    r, c = a.shape
    if (r, c) == (rows, cols):
        return a  # already tile-aligned: no extra HBM roundtrip
    return jnp.pad(a, ((0, rows - r), (0, cols - c)))


def _linear_bn_kernel(x_ref, w_ref, gamma_ref, beta_ref, o_ref, *, inv_n):
    k = pl.program_id(1)
    nk = pl.num_programs(1)

    # y_tile = x @ W^T : contract the last dims of (n_pad, tk) and (tn, tk) on the
    # MXU with f32 accumulation (no wrapper-side weight transpose needed).
    y_part = lax.dot_general(
        x_ref[...], w_ref[...],
        dimension_numbers=(((1,), (1,)), ((), ())),
        preferred_element_type=jnp.float32)

    # Output block index is constant across the k axis -> o_ref is the resident
    # f32 accumulator (no separate VMEM scratch, no final copy pass).
    @pl.when(k == 0)
    def _():
        o_ref[...] = y_part

    @pl.when(k > 0)
    def _():
        o_ref[...] += y_part

    @pl.when(k == nk - 1)
    def _():
        y = o_ref[...]                                   # (n_pad, tn) f32
        inv_n_f = jnp.float32(inv_n)
        # Padded batch rows are exactly zero (zero x rows, no bias), so they add 0
        # to both sums -> single-pass mean/var needs no row mask.
        s = jnp.sum(y, axis=0, keepdims=True)            # (1, tn)
        sq = jnp.sum(y * y, axis=0, keepdims=True)       # (1, tn)
        mean = s * inv_n_f
        var = jnp.maximum(sq * inv_n_f - mean * mean, 0.0)  # biased variance
        inv_std = lax.rsqrt(var + EPS)                   # EUP rsqrt
        scale = gamma_ref[...] * inv_std                 # (1, tn)
        shift = beta_ref[...] - mean * scale             # (1, tn)
        o_ref[...] = y * scale + shift                   # two VPU ops / element


def linear_block_forward(x, weight, bias, gamma, beta, *, use_bf16_matmul=False):
    """Forward of LinearBlock: BatchNorm1d(train-mode batch stats)(Linear(x)).

    x: (N, input_dim); weight: (output_dim, input_dim) (PyTorch convention);
    bias: (output_dim,) — accepted for API parity but cancelled exactly by
    training-mode BatchNorm1d (constant per-feature shift minus its batch mean).
    gamma/beta: BatchNorm1d affine parameters, (output_dim,).
    """
    del bias  # (x @ W.T + b) - mean(...) == x @ W.T - mean(x @ W.T)

    orig_dtype = x.dtype
    n, k_dim = x.shape
    d, k_dim_w = weight.shape
    assert k_dim_w == k_dim, "weight must be (output_dim, input_dim)"

    if use_bf16_matmul:
        # bf16-native MXU on v6e/v7x; accumulation stays f32 in the kernel.
        x = x.astype(jnp.bfloat16)
        weight = weight.astype(jnp.bfloat16)

    in_itemsize = jnp.dtype(x.dtype).itemsize
    sublane = 16 if in_itemsize == 2 else 8             # bf16 packs 2 rows/sublane

    n_pad = _round_up(n, sublane)
    tn = min(256, _round_up(d, 128))                     # lane-dense output tiles
    d_pad = _round_up(d, tn)

    ceiling = _vmem_ceiling_bytes()
    k_aligned = _round_up(k_dim, 128)
    if _estimate_vmem_bytes(n_pad, k_aligned, tn, in_itemsize) <= int(0.7 * ceiling):
        tk = k_aligned        # full-K residency: single reduction step per D tile
    else:
        tk = min(512, k_aligned)
    k_pad = _round_up(k_dim, tk)
    grid = (d_pad // tn, k_pad // tk)

    x_p = _pad2(x, n_pad, k_pad)
    w_p = _pad2(weight, d_pad, k_pad)                    # (D, K), no transpose
    g_p = _pad2(gamma.astype(jnp.float32).reshape(1, d), 1, d_pad)
    b_p = _pad2(beta.astype(jnp.float32).reshape(1, d), 1, d_pad)

    est = _estimate_vmem_bytes(n_pad, tk, tn, in_itemsize)
    vmem_limit = int(min(ceiling, max(est + est // 4 + (2 << 20), 16 << 20)))

    out_padded = pl.pallas_call(
        functools.partial(_linear_bn_kernel, inv_n=1.0 / n),
        out_shape=jax.ShapeDtypeStruct((n_pad, d_pad), jnp.float32),
        grid_spec=pltpu.PrefetchScalarGridSpec(
            num_scalar_prefetch=0,
            grid=grid,
            in_specs=[
                pl.BlockSpec((n_pad, tk), lambda di, ki: (0, ki)),   # x
                pl.BlockSpec((tn, tk), lambda di, ki: (di, ki)),     # W (D, K)
                pl.BlockSpec((1, tn), lambda di, ki: (0, di)),       # gamma
                pl.BlockSpec((1, tn), lambda di, ki: (0, di)),       # beta
            ],
            out_specs=pl.BlockSpec((n_pad, tn), lambda di, ki: (0, di)),
        ),
        compiler_params=pltpu.CompilerParams(
            # feature axis "parallel" (megacore / v7x 2-TC), reduction "arbitrary"
            dimension_semantics=("parallel", "arbitrary"),
            vmem_limit_bytes=vmem_limit,
        ),
    )(x_p, w_p, g_p, b_p)

    out = out_padded[:n, :d]
    return out if orig_dtype == jnp.float32 else out.astype(orig_dtype)


def reference_forward(x, weight, bias, gamma, beta):
    y = x @ weight.T + bias
    mean = jnp.mean(y, axis=0, keepdims=True)
    var = jnp.mean((y - mean) ** 2, axis=0, keepdims=True)
    return (y - mean) / jnp.sqrt(var + EPS) * gamma + beta


if __name__ == "__main__":
    key = jax.random.PRNGKey(0)
    k_x, k_w, k_b = jax.random.split(key, 3)

    batch = 8
    input_dim = 32
    output_dim = 16

    x = jax.random.normal(k_x, (batch, input_dim), dtype=jnp.float32)

    # Deterministic parameter init (PyTorch nn.Linear-style uniform bounds).
    bound = 1.0 / (input_dim ** 0.5)
    weight = jax.random.uniform(k_w, (output_dim, input_dim),
                                minval=-bound, maxval=bound, dtype=jnp.float32)
    bias = jax.random.uniform(k_b, (output_dim,),
                              minval=-bound, maxval=bound, dtype=jnp.float32)
    # BatchNorm1d affine defaults.
    gamma = jnp.ones((output_dim,), dtype=jnp.float32)
    beta = jnp.zeros((output_dim,), dtype=jnp.float32)

    out = jax.block_until_ready(linear_block_forward(x, weight, bias, gamma, beta))
    ref = reference_forward(x, weight, bias, gamma, beta)
    assert out.shape == (batch, output_dim)
    assert jnp.allclose(out, ref, atol=1e-5, rtol=1e-5), "mismatch vs reference"

    # Optional bf16 MXU path (v6e/v7x): sanity check only (shape + finiteness).
    out_bf16 = jax.block_until_ready(
        linear_block_forward(x, weight, bias, gamma, beta, use_bf16_matmul=True))
    assert out_bf16.shape == (batch, output_dim)
    assert bool(jnp.all(jnp.isfinite(out_bf16)))

    print("KERNEL_OK")
</pallas_src>

<mosaic_0001>
module attributes {stable_mosaic.version = 11 : i64} {
  func.func @_linear_bn_kernel(%arg0: i32, %arg1: i32, %arg2: memref<8x128xf32, #tpu.memory_space<vmem>>, %arg3: memref<128x128xf32, #tpu.memory_space<vmem>>, %arg4: memref<1x128xf32, #tpu.memory_space<vmem>>, %arg5: memref<1x128xf32, #tpu.memory_space<vmem>>, %arg6: memref<8x128xf32, #tpu.memory_space<vmem>>) attributes {dimension_semantics = [#tpu.dimension_semantics<parallel>, #tpu.dimension_semantics<arbitrary>], iteration_bounds = array<i64: 1, 1>, scalar_prefetch = 0 : i64, scratch_operands = 0 : i64, tpu.core_type = #tpu.core_type<tc>, window_params = [{transform_indices = @transform_0, window_bounds = array<i64: 8, 128>}, {transform_indices = @transform_1, window_bounds = array<i64: 128, 128>}, {transform_indices = @transform_2, window_bounds = array<i64: 1, 128>}, {transform_indices = @transform_3, window_bounds = array<i64: 1, 128>}, {transform_indices = @transform_4, window_bounds = array<i64: 8, 128>}]} {
    %c0 = arith.constant 0 : index
    %c0_0 = arith.constant 0 : index
    %0 = vector.load %arg2[%c0, %c0_0] : memref<8x128xf32, #tpu.memory_space<vmem>>, vector<8x128xf32>
    %c0_1 = arith.constant 0 : index
    %c0_2 = arith.constant 0 : index
    %1 = vector.load %arg3[%c0_1, %c0_2] : memref<128x128xf32, #tpu.memory_space<vmem>>, vector<128x128xf32>
    %cst = arith.constant dense<0.000000e+00> : vector<8x128xf32>
    %2 = tpu.matmul %0, %1, %cst {dimension_numbers = #tpu.dot_dimension_numbers<[1], [1], [0], [0], [0, 0, 1, 0], [], []>} : vector<8x128xf32>, vector<128x128xf32>, vector<8x128xf32> -> vector<8x128xf32>
    %c0_i32 = arith.constant 0 : i32
    %3 = arith.cmpi eq, %arg1, %c0_i32 : i32
    %4 = arith.extui %3 : i1 to i32
    %c0_i32_3 = arith.constant 0 : i32
    %5 = arith.cmpi ne, %4, %c0_i32_3 : i32
    scf.if %5 {
      %c0_8 = arith.constant 0 : index
      %c0_9 = arith.constant 0 : index
      %12 = vector.load %arg6[%c0_8, %c0_9] : memref<8x128xf32, #tpu.memory_space<vmem>>, vector<8x128xf32>
      tpu.vector_store %arg6[%c0_8, %c0_9], %2 {strides = array<i32>} : memref<8x128xf32, #tpu.memory_space<vmem>>, vector<8x128xf32>,
    } else {
    }
    %c0_i32_4 = arith.constant 0 : i32
    %6 = arith.cmpi sgt, %arg1, %c0_i32_4 : i32
    %7 = arith.extui %6 : i1 to i32
    %c0_i32_5 = arith.constant 0 : i32
    %8 = arith.cmpi ne, %7, %c0_i32_5 : i32
    scf.if %8 {
      %c0_8 = arith.constant 0 : index
      %c0_9 = arith.constant 0 : index
      %12 = vector.load %arg6[%c0_8, %c0_9] : memref<8x128xf32, #tpu.memory_space<vmem>>, vector<8x128xf32>
      %13 = arith.addf %12, %2 : vector<8x128xf32>
      %c0_10 = arith.constant 0 : index
      %c0_11 = arith.constant 0 : index
      %14 = vector.load %arg6[%c0_10, %c0_11] : memref<8x128xf32, #tpu.memory_space<vmem>>, vector<8x128xf32>
      tpu.vector_store %arg6[%c0_10, %c0_11], %13 {strides = array<i32>} : memref<8x128xf32, #tpu.memory_space<vmem>>, vector<8x128xf32>,
    } else {
    }
    %c0_i32_6 = arith.constant 0 : i32
    %9 = arith.cmpi eq, %arg1, %c0_i32_6 : i32
    %10 = arith.extui %9 : i1 to i32
    %c0_i32_7 = arith.constant 0 : i32
    %11 = arith.cmpi ne, %10, %c0_i32_7 : i32
    scf.if %11 {
      %c0_8 = arith.constant 0 : index
      %c0_9 = arith.constant 0 : index
      %12 = vector.load %arg6[%c0_8, %c0_9] : memref<8x128xf32, #tpu.memory_space<vmem>>, vector<8x128xf32>
      %cst_10 = arith.constant dense<0.000000e+00> : vector<128xf32>
      %13 = vector.multi_reduction <add>, %12, %cst_10 [0] : vector<8x128xf32> to vector<128xf32>
      %14 = vector.shape_cast %13 : vector<128xf32> to vector<1x128xf32>
      %15 = arith.mulf %12, %12 : vector<8x128xf32>
      %cst_11 = arith.constant dense<0.000000e+00> : vector<128xf32>
      %16 = vector.multi_reduction <add>, %15, %cst_11 [0] : vector<8x128xf32> to vector<128xf32>
      %17 = vector.shape_cast %16 : vector<128xf32> to vector<1x128xf32>
      %cst_12 = arith.constant 1.250000e-01 : f32
      %18 = vector.broadcast %cst_12 : f32 to vector<1x128xf32>
      %19 = arith.mulf %14, %18 : vector<1x128xf32>
      %cst_13 = arith.constant 1.250000e-01 : f32
      %20 = vector.broadcast %cst_13 : f32 to vector<1x128xf32>
      %21 = arith.mulf %17, %20 : vector<1x128xf32>
      %22 = arith.mulf %19, %19 : vector<1x128xf32>
      %23 = arith.subf %21, %22 : vector<1x128xf32>
      %cst_14 = arith.constant 0.000000e+00 : f32
      %24 = vector.broadcast %cst_14 : f32 to vector<1x128xf32>
      %25 = arith.maximumf %23, %24 : vector<1x128xf32>
      %cst_15 = arith.constant 9.99999974E-6 : f32
      %26 = vector.broadcast %cst_15 : f32 to vector<1x128xf32>
      %27 = arith.addf %25, %26 : vector<1x128xf32>
      %28 = math.rsqrt %27 : vector<1x128xf32>
      %c0_16 = arith.constant 0 : index
      %c0_17 = arith.constant 0 : index
      %29 = vector.load %arg4[%c0_16, %c0_17] : memref<1x128xf32, #tpu.memory_space<vmem>>, vector<1x128xf32>
      %30 = arith.mulf %29, %28 : vector<1x128xf32>
      %c0_18 = arith.constant 0 : index
      %c0_19 = arith.constant 0 : index
      %31 = vector.load %arg5[%c0_18, %c0_19] : memref<1x128xf32, #tpu.memory_space<vmem>>, vector<1x128xf32>
      %32 = arith.mulf %19, %30 : vector<1x128xf32>
      %33 = arith.subf %31, %32 : vector<1x128xf32>
      %34 = vector.broadcast %30 : vector<1x128xf32> to vector<8x128xf32>
      %35 = arith.mulf %12, %34 : vector<8x128xf32>
      %36 = vector.broadcast %33 : vector<1x128xf32> to vector<8x128xf32>
      %37 = arith.addf %35, %36 : vector<8x128xf32>
      %c0_20 = arith.constant 0 : index
      %c0_21 = arith.constant 0 : index
      %38 = vector.load %arg6[%c0_20, %c0_21] : memref<8x128xf32, #tpu.memory_space<vmem>>, vector<8x128xf32>
      tpu.vector_store %arg6[%c0_20, %c0_21], %37 {strides = array<i32>} : memref<8x128xf32, #tpu.memory_space<vmem>>, vector<8x128xf32>,
    } else {
    }
    return
  }
  func.func @transform_0(%arg0: i32, %arg1: i32) -> (i32, i32) {
    %c0_i32 = arith.constant 0 : i32
    %c0_i32_0 = arith.constant 0 : i32
    return %c0_i32, %arg1 : i32, i32
  }
  func.func @transform_1(%arg0: i32, %arg1: i32) -> (i32, i32) {
    %c0_i32 = arith.constant 0 : i32
    return %arg0, %arg1 : i32, i32
  }
  func.func @transform_2(%arg0: i32, %arg1: i32) -> (i32, i32) {
    %c0_i32 = arith.constant 0 : i32
    %c0_i32_0 = arith.constant 0 : i32
    return %c0_i32, %arg0 : i32, i32
  }
  func.func @transform_3(%arg0: i32, %arg1: i32) -> (i32, i32) {
    %c0_i32 = arith.constant 0 : i32
    %c0_i32_0 = arith.constant 0 : i32
    return %c0_i32, %arg0 : i32, i32
  }
  func.func @transform_4(%arg0: i32, %arg1: i32) -> (i32, i32) {
    %c0_i32 = arith.constant 0 : i32
    %c0_i32_0 = arith.constant 0 : i32
    return %c0_i32, %arg0 : i32, i32
  }
}

</mosaic_0001>

<llo_original>
// kernel: tpu_custom_call.1
$region0: #{tpu_custom_call.1}
  #allocation0 [shape = 'u32[]', space=smem, size = 0x4, offset = 0x4, fixed_abs, tag = 'smem constant byte address 0x4 - core index']
  #allocation1 [shape = 'u32[72,128]{1,0:T(1,128)}', space=vmem, size = 0x9000, scoped, tag = 'internal scratch']
  %s0 = inlined_call_operand.hbm [shape: f32[8,128], index: 0, kind: input, shape index: {}]
  %s1 = inlined_call_operand.hbm [shape: f32[128,128], index: 1, kind: input, shape index: {}]
  %s2 = inlined_call_operand.vmem [shape: f32[1,128], index: 2, kind: input, shape index: {}]
  %s3 = inlined_call_operand.vmem [shape: f32[1,128], index: 3, kind: input, shape index: {}]
  %s4 = inlined_call_operand.hbm [shape: f32[8,128], index: 4, kind: output, shape index: {}]
  %s5 = sld [smem:[#allocation0]]
  $region46: #{tpu_custom_call.1} parent=0
    _
  %s7 = ssub.s32 1, %s5
  %s8 = scalar_select 0, %s7, %s5
  $region1: #{tpu_custom_call.1} parent=0
    #allocation2 [shape = 'u8[4096]{0}', space=vmem, size = 0x1000, scoped, tag = 'input window, operand 0, single buffered']
    #allocation3 [shape = 's32[1]{0}', space=sflag, size = 0x4, scoped, tag = 'scoped memory for tpu_custom_call.1']
    #allocation4 [shape = 's32[1]{0}', space=sflag, size = 0x4, scoped, tag = 'scoped memory for tpu_custom_call.1']
    #allocation5 [shape = 'u8[65536]{0}', space=vmem, size = 0x10000, scoped, tag = 'input window, operand 1, single buffered']
    #allocation6 [shape = 's32[1]{0}', space=sflag, size = 0x4, scoped, tag = 'scoped memory for tpu_custom_call.1']
    #allocation7 [shape = 'u8[4096]{0}', space=vmem, size = 0x1000, scoped, tag = 'output window, operand 0, single buffered']
    %9 = vsyncpa [#allocation3], 0
    %10 = vsyncpa [#allocation6], 0
    %11 = vsyncpa [#allocation4], 0
    // Predicated region
    $region2: #{tpu_custom_call.1} parent=1 // pred_check
      _
    $region3: #{tpu_custom_call.1} parent=1 // pred_check_branch
      %13 = sbr.rel (0) target = $region5
    $region4: #{tpu_custom_call.1} parent=1 // pred_region
      %15 = vsyncadd [#allocation3], 0
      %s17 = sshll.u32 %s0, 4
      %s18 = int_to_ptr.hbm [resolvable:$true] %s17
      %s19 = sshll.u32 [#allocation2], 4
      %s20 = int_to_ptr.vmem [resolvable:$true] %s19
      %22 = dma.hbm_to_vmem [thread:$0]  %s18, 128, %s20, [#allocation3]
    $region5: #{tpu_custom_call.1} parent=1 // pred_fallthru
      _
    // Predicated region
    $region6: #{tpu_custom_call.1} parent=1 // pred_check
      _
    $region7: #{tpu_custom_call.1} parent=1 // pred_check_branch
      %24 = sbr.rel (0) target = $region9
    $region8: #{tpu_custom_call.1} parent=1 // pred_region
      %26 = vsyncadd [#allocation6], 0
      %s27 = sshll.u32 %s1, 4
      %s28 = int_to_ptr.hbm [resolvable:$true] %s27
      %s29 = sshll.u32 [#allocation5], 4
      %s30 = int_to_ptr.vmem [resolvable:$true] %s29
      %35 = dma.hbm_to_vmem [thread:$0]  %s28, 2048, %s30, [#allocation6], 128, 128, 8
    $region9: #{tpu_custom_call.1} parent=1 // pred_fallthru
      _
    // Predicated region
    $region10: #{tpu_custom_call.1} parent=1 // pred_check
      _
    $region11: #{tpu_custom_call.1} parent=1 // pred_check_branch
      %37 = sbr.rel (0) target = $region13
    $region12: #{tpu_custom_call.1} parent=1 // pred_region
      _
    $region13: #{tpu_custom_call.1} parent=1 // pred_fallthru
      _
    // Predicated region
    $region14: #{tpu_custom_call.1} parent=1 // pred_check
      _
    $region15: #{tpu_custom_call.1} parent=1 // pred_check_branch
      %39 = sbr.rel (0) target = $region17
    $region16: #{tpu_custom_call.1} parent=1 // pred_region
      _
    $region17: #{tpu_custom_call.1} parent=1 // pred_fallthru
      _
    // Predicated region
    $region18: #{tpu_custom_call.1} parent=1 // pred_check
      _
    $region19: #{tpu_custom_call.1} parent=1 // pred_check_branch
      %41 = sbr.rel (0) target = $region21
    $region20: #{tpu_custom_call.1} parent=1 // pred_region
      %43 = dma.done [#allocation3], 128
    $region21: #{tpu_custom_call.1} parent=1 // pred_fallthru
      _
    // Predicated region
    $region22: #{tpu_custom_call.1} parent=1 // pred_check
      _
    $region23: #{tpu_custom_call.1} parent=1 // pred_check_branch
      %45 = sbr.rel (0) target = $region25
    $region24: #{tpu_custom_call.1} parent=1 // pred_region
      %47 = dma.done [#allocation6], 2048
    $region25: #{tpu_custom_call.1} parent=1 // pred_fallthru
      _
    %v48 = vld [vmem:[#allocation2] sm:$0xff]
    %v49 = vld [vmem:[#allocation5] sm:$0xff]
    %v50 = vld [vmem:[#allocation5 + $0x8] sm:$0xff]
    %v51 = vld [vmem:[#allocation5 + $0x10] sm:$0xff]
    %v52 = vld [vmem:[#allocation5 + $0x18] sm:$0xff]
    %v53 = vld [vmem:[#allocation5 + $0x20] sm:$0xff]
    %v54 = vld [vmem:[#allocation5 + $0x28] sm:$0xff]
    %v55 = vld [vmem:[#allocation5 + $0x30] sm:$0xff]
    %v56 = vld [vmem:[#allocation5 + $0x38] sm:$0xff]
    %v57 = vld [vmem:[#allocation5 + $0x40] sm:$0xff]
    %v58 = vld [vmem:[#allocation5 + $0x48] sm:$0xff]
    %v59 = vld [vmem:[#allocation5 + $0x50] sm:$0xff]
    %v60 = vld [vmem:[#allocation5 + $0x58] sm:$0xff]
    %v61 = vld [vmem:[#allocation5 + $0x60] sm:$0xff]
    %v62 = vld [vmem:[#allocation5 + $0x68] sm:$0xff]
    %v63 = vld [vmem:[#allocation5 + $0x70] sm:$0xff]
    %v64 = vld [vmem:[#allocation5 + $0x78] sm:$0xff]
    %65 = vmatpush.xpose.msra.mxu0 %v64
    %66 = vmatpush.xpose.msra.mxu0 %v63
    %67 = vmatpush.xpose.msra.mxu0 %v62
    %68 = vmatpush.xpose.msra.mxu0 %v61
    %69 = vmatpush.xpose.msra.mxu0 %v60
    %70 = vmatpush.xpose.msra.mxu0 %v59
    %71 = vmatpush.xpose.msra.mxu0 %v58
    %72 = vmatpush.xpose.msra.mxu0 %v57
    %73 = vmatpush.xpose.msra.mxu0 %v56
    %74 = vmatpush.xpose.msra.mxu0 %v55
    %75 = vmatpush.xpose.msra.mxu0 %v54
    %76 = vmatpush.xpose.msra.mxu0 %v53
    %77 = vmatpush.xpose.msra.mxu0 %v52
    %78 = vmatpush.xpose.msra.mxu0 %v51
    %79 = vmatpush.xpose.msra.mxu0 %v50
    %80 = vmatpush.xpose.msra.mxu0 %v49
    %81 = vmatmul.f32.gmra.mxu0 %v48
    %v82 = vpop.f32.mrf.mxu0
    %v83 = vadd.f32 0.0, %v82
    %84 = vdwg.mxu0
    %p85 = scmp.eq.s32.totalorder 0, 0
    // Predicated region
    $region26: #{tpu_custom_call.1} parent=1 // pred_check
      %p86 = pneg %p85
    $region27: #{tpu_custom_call.1} parent=1 // pred_check_branch
      %88 = sbr.rel (%p86) target = $region29
    $region28: #{tpu_custom_call.1} parent=1 // pred_region
      %89 = vst [vmem:[#allocation7] sm:$0xff] %v83
    $region29: #{tpu_custom_call.1} parent=1 // pred_fallthru
      _
    %p90 = scmp.gt.s32.totalorder 0, 0
    // Predicated region
    $region30: #{tpu_custom_call.1} parent=1 // pred_check
      %p91 = pneg %p90
    $region31: #{tpu_custom_call.1} parent=1 // pred_check_branch
      %93 = sbr.rel (%p91) target = $region33
    $region32: #{tpu_custom_call.1} parent=1 // pred_region
      %v94 = vld [vmem:[#allocation7] sm:$0xff]
      %v95 = vadd.f32 %v94, %v83
      %96 = vst [vmem:[#allocation7] sm:$0xff] %v95
    $region33: #{tpu_custom_call.1} parent=1 // pred_fallthru
      _
    // Predicated region
    $region34: #{tpu_custom_call.1} parent=1 // pred_check
      %p97 = pneg %p85
    $region35: #{tpu_custom_call.1} parent=1 // pred_check_branch
      %99 = sbr.rel (%p97) target = $region37
    $region36: #{tpu_custom_call.1} parent=1 // pred_region
      %v100 = vld [vmem:[#allocation7] sm:$0xff]
      %v101 = vrot.slane %v100, 4
      %v102 = vadd.f32 %v100, %v101
      %v103 = vrot.slane %v102, 2
      %v104 = vadd.f32 %v102, %v103
      %v105 = vrot.slane %v104, 1
      %v106 = vadd.f32 %v104, %v105
      %v107 = vmul.f32 %v100, %v100
      %v108 = vrot.slane %v107, 4
      %v109 = vadd.f32 %v107, %v108
      %v110 = vrot.slane %v109, 2
      %v111 = vadd.f32 %v109, %v110
      %v112 = vrot.slane %v111, 1
      %v113 = vadd.f32 %v111, %v112
      %v114 = vmul.f32 %v106, 0.125
      %v115 = vmul.f32 %v113, 0.125
      %v116 = vmul.f32 %v114, %v114
      %v117 = vsub.f32 %v115, %v116
      %v118 = vmax.f32 %v117, 0.0
      %v119 = vadd.f32 %v118, 1e-05
      %v120 = vrsqrt.pop %v119
      %v121 = vmul.f32 %v120, %v119
      %v122 = vmul.f32 %v121, %v120
      %v123 = vmul.f32 0.5, %v122
      %v124 = vsub.f32 1.5, %v123
      %v125 = vmul.f32 %v120, %v124
      %vm126 = vweird.f32 %v119
      %vm127 = vweird.f32 %v120
      %vm128 = vmor %vm126, %vm127
      %v129 = vsel %vm128, %v120, %v125
      %v130 = vld [vmem:[%s2] sm:$0x1]
      %v131 = vmul.f32 %v130, %v129
      %v132 = vld [vmem:[%s3] sm:$0x1]
      %v133 = vmul.f32 %v114, %v131
      %v134 = vsub.f32 %v132, %v133
      %v136 = vperm.slane %v131, 0
      %v138 = vmul.f32 %v100, %v136
      %v140 = vperm.slane %v134, 0
      %v142 = vadd.f32 %v138, %v140
      %143 = vst [vmem:[#allocation7] sm:$0xff] %v142
    $region37: #{tpu_custom_call.1} parent=1 // pred_fallthru
      _
    // Predicated region
    $region38: #{tpu_custom_call.1} parent=1 // pred_check
      _
    $region39: #{tpu_custom_call.1} parent=1 // pred_check_branch
      %145 = sbr.rel (0) target = $region41
    $region40: #{tpu_custom_call.1} parent=1 // pred_region
      %147 = vsyncadd [#allocation4], 0
      %s149 = sshll.u32 [#allocation7], 4
      %s150 = int_to_ptr.vmem [resolvable:$true] %s149
      %s151 = sshll.u32 %s4, 4
      %s152 = int_to_ptr.hbm [resolvable:$true] %s151
      %154 = dma.vmem_to_hbm [thread:$0]  %s150, 128, %s152, [#allocation4]
    $region41: #{tpu_custom_call.1} parent=1 // pred_fallthru
      _
    // Predicated region
    $region42: #{tpu_custom_call.1} parent=1 // pred_check
      _
    $region43: #{tpu_custom_call.1} parent=1 // pred_check_branch
      %156 = sbr.rel (0) target = $region45
    $region44: #{tpu_custom_call.1} parent=1 // pred_region
      %158 = dma.done [#allocation4], 128
    $region45: #{tpu_custom_call.1} parent=1 // pred_fallthru
      _
    %159 = vsyncpa [#allocation3], 1
    %160 = vsyncpa [#allocation6], 1
    %161 = vsyncpa [#allocation4], 1

</llo_original>
